<compile_context>
chip_gen: v5e
topology: v5e:2x2
jax: 0.10.0
libtpu: 0.0.40
codegen_flags: <defaults>
</compile_context>

<pallas_src>
import jax
import jax.numpy as jnp
from jax.experimental import pallas as pl
from jax.experimental.pallas import tpu as pltpu


# --------------------------------------------------------------------------
# Kernel: out = x @ Wx + u @ Wu + b   (bf16 MXU operands, f32 accumulation)
# --------------------------------------------------------------------------
def _embedding_kernel(x_ref, u_ref, wx_ref, wu_ref, b_ref, o_ref):
    # Cast activations to the weight dtype in-register (no extra HBM pass).
    x = x_ref[...].astype(wx_ref.dtype)
    u = u_ref[...].astype(wu_ref.dtype)
    acc = jnp.dot(x, wx_ref[...], preferred_element_type=jnp.float32)
    acc = acc + jnp.dot(u, wu_ref[...], preferred_element_type=jnp.float32)
    o_ref[...] = (acc + b_ref[...]).astype(o_ref.dtype)


# --------------------------------------------------------------------------
# One-time algebraic fusion of the two back-to-back Linears (hoisted out of
# the per-call forward path — pure savings of 2*p_dim^3 FLOPs + HBM passes).
#   out = x @ (Wxi@Wxo) + u @ (Wui@Wuo) + (bxi@Wxo + bxo + bui@Wuo + buo)
# --------------------------------------------------------------------------
def prepare_params(params, weight_dtype=jnp.bfloat16):
    (wxi, bxi), (wui, bui), (wxo, bxo), (wuo, buo) = params
    wx = (wxi @ wxo).astype(weight_dtype)                       # [x_dim, p_dim]
    wu = (wui @ wuo).astype(weight_dtype)                       # [p_dim, p_dim]
    bias = (bxi @ wxo + bxo + bui @ wuo + buo).astype(jnp.float32)  # [1, p_dim]
    return wx, wu, bias


def embedding_forward(x, u, fused_params, tile_b=512, tile_n=512):
    """x: [B, x_dim] (f32/bf16), u: [B, p_dim] -> [B, p_dim] in x.dtype."""
    wx, wu, bias = fused_params
    B, x_dim = x.shape
    p_dim = wx.shape[1]
    out_dtype = x.dtype

    # ---- tile selection: no wrapper-side padding ---------------------------
    # block == full array dim is always legal; otherwise use 256-aligned tiles.
    tb = B if B <= tile_b else tile_b                    # 512 = 256-multiple
    if p_dim <= tile_n or p_dim % 128 != 0:
        tn = p_dim                                       # full-array block
    else:
        tn = max((tile_n // 256) * 256, 128)             # N-tile for large p_dim

    grid_n = pl.cdiv(p_dim, tn)
    grid_b = pl.cdiv(B, tb)                              # no batch padding
    grid = (grid_n, grid_b)     # batch innermost -> weight tile stays resident

    a_sz = jnp.dtype(x.dtype).itemsize
    u_sz = jnp.dtype(u.dtype).itemsize
    w_sz = jnp.dtype(wx.dtype).itemsize
    o_sz = jnp.dtype(out_dtype).itemsize

    # Explicit scoped-VMEM budget: double-buffered activations/output +
    # single-buffered resident weight/bias tiles, plus headroom.
    vmem_bytes = (2 * tb * x_dim * a_sz + 2 * tb * p_dim * u_sz
                  + 2 * tb * tn * o_sz
                  + x_dim * tn * w_sz + p_dim * tn * w_sz + tn * 4)
    vmem_limit = int(min(128 << 20, max(2 * vmem_bytes, 32 << 20)))

    cost = pl.CostEstimate(
        flops=2 * B * (x_dim + p_dim) * p_dim,
        transcendentals=0,
        bytes_accessed=(x.size * a_sz + u.size * u_sz
                        + wx.size * w_sz + wu.size * w_sz + bias.size * 4
                        + B * p_dim * o_sz),
    )

    resident = pl.Buffered(1)   # constant-index blocks need no double buffer

    return pl.pallas_call(
        _embedding_kernel,
        out_shape=jax.ShapeDtypeStruct((B, p_dim), out_dtype),
        grid=grid,
        in_specs=[
            pl.BlockSpec((tb, x_dim), lambda j, i: (i, 0)),               # x
            pl.BlockSpec((tb, p_dim), lambda j, i: (i, 0)),               # u
            pl.BlockSpec((x_dim, tn), lambda j, i: (0, j),
                         pipeline_mode=resident),                        # Wx
            pl.BlockSpec((p_dim, tn), lambda j, i: (0, j),
                         pipeline_mode=resident),                        # Wu
            pl.BlockSpec((1, tn), lambda j, i: (0, j),
                         pipeline_mode=resident),                        # bias
        ],
        out_specs=pl.BlockSpec((tb, tn), lambda j, i: (i, j)),
        compiler_params=pltpu.CompilerParams(
            dimension_semantics=("parallel", "parallel"),
            vmem_limit_bytes=vmem_limit,
        ),
        cost_estimate=cost,
    )(x, u, wx, wu, bias)


# --------------------------------------------------------------------------
# Parameter init (PyTorch nn.Linear-style) and pure-JAX reference
# --------------------------------------------------------------------------
def init_params(key, x_in, p_dim):
    """Weights stored as [in, out]; biases as [1, out]."""
    def linear(k, fan_in, fan_out):
        kw, kb = jax.random.split(k)
        bound = 1.0 / jnp.sqrt(fan_in)
        w = jax.random.uniform(kw, (fan_in, fan_out), jnp.float32, -bound, bound)
        b = jax.random.uniform(kb, (1, fan_out), jnp.float32, -bound, bound)
        return w, b

    k1, k2, k3, k4 = jax.random.split(key, 4)
    return (
        linear(k1, x_in, p_dim),   # x_in
        linear(k2, p_dim, p_dim),  # u_in
        linear(k3, p_dim, p_dim),  # x_out
        linear(k4, p_dim, p_dim),  # u_out
    )


def embedding_reference(x, u, params):
    (wxi, bxi), (wui, bui), (wxo, bxo), (wuo, buo) = params
    x_emb = (x @ wxi + bxi) @ wxo + bxo
    u_emb = (u @ wui + bui) @ wuo + buo
    return x_emb + u_emb


if __name__ == "__main__":
    x_in_dim = 32
    p_dim = 16
    batch = 8

    key = jax.random.PRNGKey(0)
    kx, ku, kp = jax.random.split(key, 3)

    x = jax.random.normal(kx, (batch, x_in_dim), jnp.float32)
    u = jax.random.normal(ku, (batch, p_dim), jnp.float32)
    params = init_params(kp, x_in_dim, p_dim)

    # Fused weights are computed ONCE here (outside the per-call path).
    fused = prepare_params(params)

    out = embedding_forward(x, u, fused)
    out = jax.block_until_ready(out)

    ref = embedding_reference(x, u, params)
    assert out.shape == (batch, p_dim)
    assert out.dtype == x.dtype
    # bf16 MXU operands + fused-weight rounding order -> relaxed tolerance.
    assert jnp.allclose(out, ref, atol=2e-2, rtol=2e-2), "mismatch vs reference"

    print("KERNEL_OK")
</pallas_src>

<mosaic_0001>
module attributes {stable_mosaic.version = 11 : i64} {
  func.func @_embedding_kernel(%arg0: i32, %arg1: i32, %arg2: memref<8x32xf32, #tpu.memory_space<vmem>>, %arg3: memref<8x16xf32, #tpu.memory_space<vmem>>, %arg4: memref<32x16xbf16, #tpu.memory_space<vmem>>, %arg5: memref<16x16xbf16, #tpu.memory_space<vmem>>, %arg6: memref<1x16xf32, #tpu.memory_space<vmem>>, %arg7: memref<8x16xf32, #tpu.memory_space<vmem>>) attributes {dimension_semantics = [#tpu.dimension_semantics<parallel>, #tpu.dimension_semantics<parallel>], iteration_bounds = array<i64: 1, 1>, scalar_prefetch = 0 : i64, scratch_operands = 0 : i64, tpu.core_type = #tpu.core_type<tc>, window_params = [{transform_indices = @transform_0, window_bounds = array<i64: 8, 32>}, {transform_indices = @transform_1, window_bounds = array<i64: 8, 16>}, {pipeline_mode = #tpu.pipeline_mode<synchronous>, transform_indices = @transform_2, window_bounds = array<i64: 32, 16>}, {pipeline_mode = #tpu.pipeline_mode<synchronous>, transform_indices = @transform_3, window_bounds = array<i64: 16, 16>}, {pipeline_mode = #tpu.pipeline_mode<synchronous>, transform_indices = @transform_4, window_bounds = array<i64: 1, 16>}, {transform_indices = @transform_5, window_bounds = array<i64: 8, 16>}]} {
    %c0 = arith.constant 0 : index
    %c0_0 = arith.constant 0 : index
    %0 = vector.load %arg2[%c0, %c0_0] : memref<8x32xf32, #tpu.memory_space<vmem>>, vector<8x32xf32>
    %1 = arith.truncf %0 : vector<8x32xf32> to vector<8x32xbf16>
    %c0_1 = arith.constant 0 : index
    %c0_2 = arith.constant 0 : index
    %2 = vector.load %arg3[%c0_1, %c0_2] : memref<8x16xf32, #tpu.memory_space<vmem>>, vector<8x16xf32>
    %3 = arith.truncf %2 : vector<8x16xf32> to vector<8x16xbf16>
    %c0_3 = arith.constant 0 : index
    %c0_4 = arith.constant 0 : index
    %4 = vector.load %arg4[%c0_3, %c0_4] : memref<32x16xbf16, #tpu.memory_space<vmem>>, vector<32x16xbf16>
    %cst = arith.constant dense<0.000000e+00> : vector<8x16xf32>
    %5 = tpu.matmul %1, %4, %cst {dimension_numbers = #tpu.dot_dimension_numbers<[1], [0], [0], [1], [0, 0, 1, 1], [], []>} : vector<8x32xbf16>, vector<32x16xbf16>, vector<8x16xf32> -> vector<8x16xf32>
    %c0_5 = arith.constant 0 : index
    %c0_6 = arith.constant 0 : index
    %6 = vector.load %arg5[%c0_5, %c0_6] : memref<16x16xbf16, #tpu.memory_space<vmem>>, vector<16x16xbf16>
    %cst_7 = arith.constant dense<0.000000e+00> : vector<8x16xf32>
    %7 = tpu.matmul %3, %6, %cst_7 {dimension_numbers = #tpu.dot_dimension_numbers<[1], [0], [0], [1], [0, 0, 1, 1], [], []>} : vector<8x16xbf16>, vector<16x16xbf16>, vector<8x16xf32> -> vector<8x16xf32>
    %8 = arith.addf %5, %7 : vector<8x16xf32>
    %c0_8 = arith.constant 0 : index
    %c0_9 = arith.constant 0 : index
    %9 = vector.load %arg6[%c0_8, %c0_9] : memref<1x16xf32, #tpu.memory_space<vmem>>, vector<1x16xf32>
    %10 = vector.broadcast %9 : vector<1x16xf32> to vector<8x16xf32>
    %11 = arith.addf %8, %10 : vector<8x16xf32>
    %c0_10 = arith.constant 0 : index
    %c0_11 = arith.constant 0 : index
    %12 = vector.load %arg7[%c0_10, %c0_11] : memref<8x16xf32, #tpu.memory_space<vmem>>, vector<8x16xf32>
    tpu.vector_store %arg7[%c0_10, %c0_11], %11 {strides = array<i32>} : memref<8x16xf32, #tpu.memory_space<vmem>>, vector<8x16xf32>,
    return
  }
  func.func @transform_0(%arg0: i32, %arg1: i32) -> (i32, i32) {
    %c0_i32 = arith.constant 0 : i32
    %c0_i32_0 = arith.constant 0 : i32
    return %arg1, %c0_i32 : i32, i32
  }
  func.func @transform_1(%arg0: i32, %arg1: i32) -> (i32, i32) {
    %c0_i32 = arith.constant 0 : i32
    %c0_i32_0 = arith.constant 0 : i32
    return %arg1, %c0_i32 : i32, i32
  }
  func.func @transform_2(%arg0: i32, %arg1: i32) -> (i32, i32) {
    %c0_i32 = arith.constant 0 : i32
    %c0_i32_0 = arith.constant 0 : i32
    return %c0_i32, %arg0 : i32, i32
  }
  func.func @transform_3(%arg0: i32, %arg1: i32) -> (i32, i32) {
    %c0_i32 = arith.constant 0 : i32
    %c0_i32_0 = arith.constant 0 : i32
    return %c0_i32, %arg0 : i32, i32
  }
  func.func @transform_4(%arg0: i32, %arg1: i32) -> (i32, i32) {
    %c0_i32 = arith.constant 0 : i32
    %c0_i32_0 = arith.constant 0 : i32
    return %c0_i32, %arg0 : i32, i32
  }
  func.func @transform_5(%arg0: i32, %arg1: i32) -> (i32, i32) {
    %c0_i32 = arith.constant 0 : i32
    return %arg1, %arg0 : i32, i32
  }
}

</mosaic_0001>

<llo_original>
// kernel: tpu_custom_call.1
$region0: #{tpu_custom_call.1}
  #allocation0 [shape = 'u32[]', space=smem, size = 0x4, offset = 0x4, fixed_abs, tag = 'smem constant byte address 0x4 - core index']
  #allocation1 [shape = 'u32[72,128]{1,0:T(1,128)}', space=vmem, size = 0x9000, scoped, tag = 'internal scratch']
  %s0 = inlined_call_operand.vmem [shape: f32[8,32], index: 0, kind: input, shape index: {}]
  %s1 = inlined_call_operand.vmem [shape: f32[8,16], index: 1, kind: input, shape index: {}]
  %s2 = inlined_call_operand.vmem [shape: bf16[32,16], index: 2, kind: input, shape index: {}]
  %s3 = inlined_call_operand.vmem [shape: bf16[16,16], index: 3, kind: input, shape index: {}]
  %s4 = inlined_call_operand.vmem [shape: f32[1,16], index: 4, kind: input, shape index: {}]
  %s5 = inlined_call_operand.hbm [shape: f32[8,16], index: 5, kind: output, shape index: {}]
  %s6 = sld [smem:[#allocation0]]
  $region30: #{tpu_custom_call.1} parent=0
    _
  %s8 = ssub.s32 1, %s6
  %s9 = scalar_select 0, %s8, %s6
  $region1: #{tpu_custom_call.1} parent=0
    #allocation2 [shape = 'u8[4096]{0}', space=vmem, size = 0x1000, scoped, tag = 'output window, operand 0, single buffered']
    #allocation3 [shape = 's32[1]{0}', space=sflag, size = 0x4, scoped, tag = 'scoped memory for tpu_custom_call.1']
    %10 = vsyncpa [#allocation3], 0
    // Predicated region
    $region2: #{tpu_custom_call.1} parent=1 // pred_check
      _
    $region3: #{tpu_custom_call.1} parent=1 // pred_check_branch
      %12 = sbr.rel (0) target = $region5
    $region4: #{tpu_custom_call.1} parent=1 // pred_region
      _
    $region5: #{tpu_custom_call.1} parent=1 // pred_fallthru
      _
    // Predicated region
    $region6: #{tpu_custom_call.1} parent=1 // pred_check
      _
    $region7: #{tpu_custom_call.1} parent=1 // pred_check_branch
      %14 = sbr.rel (0) target = $region9
    $region8: #{tpu_custom_call.1} parent=1 // pred_region
      _
    $region9: #{tpu_custom_call.1} parent=1 // pred_fallthru
      _
    // Predicated region
    $region10: #{tpu_custom_call.1} parent=1 // pred_check
      _
    $region11: #{tpu_custom_call.1} parent=1 // pred_check_branch
      %16 = sbr.rel (0) target = $region13
    $region12: #{tpu_custom_call.1} parent=1 // pred_region
      _
    $region13: #{tpu_custom_call.1} parent=1 // pred_fallthru
      _
    // Predicated region
    $region14: #{tpu_custom_call.1} parent=1 // pred_check
      _
    $region15: #{tpu_custom_call.1} parent=1 // pred_check_branch
      %18 = sbr.rel (0) target = $region17
    $region16: #{tpu_custom_call.1} parent=1 // pred_region
      _
    $region17: #{tpu_custom_call.1} parent=1 // pred_fallthru
      _
    // Predicated region
    $region18: #{tpu_custom_call.1} parent=1 // pred_check
      _
    $region19: #{tpu_custom_call.1} parent=1 // pred_check_branch
      %20 = sbr.rel (0) target = $region21
    $region20: #{tpu_custom_call.1} parent=1 // pred_region
      _
    $region21: #{tpu_custom_call.1} parent=1 // pred_fallthru
      _
    %v22 = vld [vmem:[%s0] sm:$0xff]
    %v23 = vpack.c.bf16 %v22, %v22
    %v24 = vld [vmem:[%s1] sm:$0xff]
    %v25 = vpack.c.bf16 %v24, %v24
    %v26 = vld [vmem:[%s2] sm:$0xf]
    %v27 = vld [vmem:[%s2 + $0x4] sm:$0xf]
    %v28 = vld [vmem:[%s2 + $0x8] sm:$0xf]
    %v29 = vld [vmem:[%s2 + $0xc] sm:$0xf]
    %v30 = vld [vmem:[%s3] sm:$0xf]
    %v31 = vld [vmem:[%s3 + $0x4] sm:$0xf]
    %v34 = vunpack.c.l.b16 %v30
    %v35 = vunpack.c.l.b16 %v31
    %v36 = vpack.c.b16 %v35, %v34
    %vm38 = vcmask 130048
    %v40 = vsel %vm38, %v25, 0
    %42 = vmatpush.bf16.msra.mxu0 0
    %43 = vmatpush.bf16.msra.mxu0 0
    %44 = vmatpush.bf16.msra.mxu0 0
    %45 = vmatpush.bf16.msra.mxu0 0
    %46 = vmatpush.bf16.msra.mxu0 0
    %47 = vmatpush.bf16.msra.mxu0 0
    %48 = vmatpush.bf16.msra.mxu0 0
    %49 = vmatpush.bf16.msra.mxu0 %v36
    %50 = vmatmul.bf16.gmra.mxu0 %v40
    %v51 = vpop.f32.mrf.mxu0
    %v52 = vadd.f32 0.0, %v51
    %v53 = vpop.f32.mrf.mxu0
    %54 = vdwg.mxu0
    %v59 = vunpack.c.l.b16 %v26
    %v60 = vunpack.c.l.b16 %v27
    %v61 = vunpack.c.l.b16 %v28
    %v62 = vunpack.c.l.b16 %v29
    %v63 = vpack.c.b16 %v60, %v59
    %v64 = vpack.c.b16 %v62, %v61
    %vm67 = vcmask 261120
    %v69 = vsel %vm67, %v23, 0
    %71 = vmatpush.bf16.msra.mxu0 0
    %72 = vmatpush.bf16.msra.mxu0 0
    %73 = vmatpush.bf16.msra.mxu0 0
    %74 = vmatpush.bf16.msra.mxu0 0
    %75 = vmatpush.bf16.msra.mxu0 0
    %76 = vmatpush.bf16.msra.mxu0 0
    %77 = vmatpush.bf16.msra.mxu0 %v64
    %78 = vmatpush.bf16.msra.mxu0 %v63
    %79 = vmatmul.bf16.gmra.mxu0 %v69
    %v80 = vpop.f32.mrf.mxu0
    %v81 = vadd.f32 %v52, %v80
    %v82 = vpop.f32.mrf.mxu0
    %83 = vdwg.mxu0
    %v84 = vld [vmem:[%s4] sm:$0x1]
    %v86 = vperm.slane %v84, 0
    %v88 = vadd.f32 %v81, %v86
    %89 = vst.msk [vmem:[#allocation2] sm:$0xff] %vm38, %v88
    // Predicated region
    $region22: #{tpu_custom_call.1} parent=1 // pred_check
      _
    $region23: #{tpu_custom_call.1} parent=1 // pred_check_branch
      %91 = sbr.rel (0) target = $region25
    $region24: #{tpu_custom_call.1} parent=1 // pred_region
      %93 = vsyncadd [#allocation3], 0
      %s95 = sshll.u32 [#allocation2], 4
      %s96 = int_to_ptr.vmem [resolvable:$true] %s95
      %s97 = sshll.u32 %s5, 4
      %s98 = int_to_ptr.hbm [resolvable:$true] %s97
      %100 = dma.vmem_to_hbm [thread:$0]  %s96, 128, %s98, [#allocation3]
    $region25: #{tpu_custom_call.1} parent=1 // pred_fallthru
      _
    // Predicated region
    $region26: #{tpu_custom_call.1} parent=1 // pred_check
      _
    $region27: #{tpu_custom_call.1} parent=1 // pred_check_branch
      %102 = sbr.rel (0) target = $region29
    $region28: #{tpu_custom_call.1} parent=1 // pred_region
      %104 = dma.done [#allocation3], 128
    $region29: #{tpu_custom_call.1} parent=1 // pred_fallthru
      _
    %105 = vsyncpa [#allocation3], 1

</llo_original>
